<compile_context>
chip_gen: v6e
topology: v6e:2x2x1
jax: 0.10.0
libtpu: 0.0.40
codegen_flags: <defaults>
</compile_context>

<pallas_src>
import jax
import jax.numpy as jnp
from jax import lax
from jax.experimental import pallas as pl
from jax.experimental.pallas import tpu as pltpu


def value_mlp_kernel(x_ref, w1_ref, b1_ref, w2_ref, b2_ref, w3_ref, b3_ref, o_ref):
    # x_ref: (TB, num_inputs) batch-major tile
    # weights: (out, in); biases: (out, 1); o_ref: (1, TB) feature-major tile
    x = x_ref[...]
    # Contract the feature axis of both operands: (64, n_in) x (TB, n_in) -> (64, TB).
    h1 = jnp.tanh(
        lax.dot_general(
            w1_ref[...], x, (((1,), (1,)), ((), ())),
            preferred_element_type=jnp.float32,
        )
        + b1_ref[...]
    )
    h2 = jnp.tanh(
        jnp.dot(w2_ref[...], h1, preferred_element_type=jnp.float32) + b2_ref[...]
    )
    out = jnp.dot(w3_ref[...], h2, preferred_element_type=jnp.float32) + b3_ref[...]
    o_ref[...] = out.astype(o_ref.dtype)


def _round_up(a, m):
    return ((a + m - 1) // m) * m


def value_forward(x, params, *, tb_max=8192):
    """x: (B, num_inputs) float32 -> (B, 1) float32 state values."""
    w1, b1, w2, b2, w3, b3 = params
    B, n_in = x.shape

    LANE = 128
    # Batch tile: a multiple of 128, large enough to amortize per-step grid
    # overhead, but sized so the grid has >=2 steps when the batch spans more
    # than one lane tile (lets v7x shard the parallel axis across both TCs).
    b_lanes = _round_up(max(B, 1), LANE)
    tb = min(tb_max, max(LANE, _round_up(pl.cdiv(b_lanes, 2), LANE)))
    n_blocks = pl.cdiv(B, tb)
    b_out = n_blocks * tb  # lane-dense padded output -> every store is unmasked

    out = pl.pallas_call(
        value_mlp_kernel,
        out_shape=jax.ShapeDtypeStruct((1, b_out), jnp.float32),
        grid=(n_blocks,),
        in_specs=[
            # x streams batch-major; ragged last block handled by Pallas.
            pl.BlockSpec((tb, n_in), lambda i: (i, 0)),
            # Weights / biases: constant index_map -> VMEM-resident across steps.
            pl.BlockSpec(w1.shape, lambda i: (0, 0)),
            pl.BlockSpec(b1.shape, lambda i: (0, 0)),
            pl.BlockSpec(w2.shape, lambda i: (0, 0)),
            pl.BlockSpec(b2.shape, lambda i: (0, 0)),
            pl.BlockSpec(w3.shape, lambda i: (0, 0)),
            pl.BlockSpec(b3.shape, lambda i: (0, 0)),
        ],
        out_specs=pl.BlockSpec((1, tb), lambda i: (0, i)),
        compiler_params=pltpu.CompilerParams(
            dimension_semantics=("parallel",),
            vmem_limit_bytes=48 * 1024 * 1024,
        ),
    )(x, w1, b1, w2, b2, w3, b3)

    # Strip batch padding; (1, B) -> (B, 1) is a free reshape.
    return out[:, :B].T


def init_params(key, num_inputs):
    """Deterministic init mimicking PyTorch nn.Linear defaults:
    U(-1/sqrt(fan_in), 1/sqrt(fan_in)) for both weight and bias,
    then value_head.weight *= 0.1 and value_head.bias *= 0.0.
    Weights stored (out, in); biases stored (out, 1)."""
    def linear_init(k, fan_in, fan_out):
        kw, kb = jax.random.split(k)
        bound = 1.0 / jnp.sqrt(fan_in)
        w = jax.random.uniform(kw, (fan_out, fan_in), jnp.float32, -bound, bound)
        b = jax.random.uniform(kb, (fan_out, 1), jnp.float32, -bound, bound)
        return w, b

    k1, k2, k3 = jax.random.split(key, 3)
    w1, b1 = linear_init(k1, num_inputs, 64)
    w2, b2 = linear_init(k2, 64, 64)
    w3, b3 = linear_init(k3, 64, 1)
    w3 = w3 * 0.1
    b3 = b3 * 0.0
    return (w1, b1, w2, b2, w3, b3)


def value_reference(x, params):
    w1, b1, w2, b2, w3, b3 = params
    h1 = jnp.tanh(x @ w1.T + b1.T)
    h2 = jnp.tanh(h1 @ w2.T + b2.T)
    return h2 @ w3.T + b3.T


if __name__ == "__main__":
    # LunarLanderContinuous-v2 observation space has 8 dims.
    num_inputs = 8

    key = jax.random.PRNGKey(0)
    kx, kp, kx2, kx3 = jax.random.split(key, 4)
    params = init_params(kp, num_inputs)

    # Small batch (toy PPO rollout step): single ragged block (B < 128).
    x_small = jax.random.normal(kx, (8, num_inputs), dtype=jnp.float32)
    out_small = jax.block_until_ready(value_forward(x_small, params))
    ref_small = value_reference(x_small, params)
    assert out_small.shape == (8, 1)
    assert jnp.allclose(out_small, ref_small, atol=2e-5, rtol=1e-4)

    # Non-multiple-of-128 batch: 2-step grid with a ragged last block.
    x_med = jax.random.normal(kx2, (300, num_inputs), dtype=jnp.float32)
    out_med = jax.block_until_ready(value_forward(x_med, params))
    ref_med = value_reference(x_med, params)
    assert out_med.shape == (300, 1)
    assert jnp.allclose(out_med, ref_med, atol=2e-5, rtol=1e-4)

    # Small tile to exercise a >2-step pipelined grid + ragged last block.
    x_big = jax.random.normal(kx3, (300, num_inputs), dtype=jnp.float32)
    out_big = jax.block_until_ready(value_forward(x_big, params, tb_max=128))
    ref_big = value_reference(x_big, params)
    assert out_big.shape == (300, 1)
    assert jnp.allclose(out_big, ref_big, atol=2e-5, rtol=1e-4)

    print("KERNEL_OK")
</pallas_src>

<mosaic_0001>
module attributes {stable_mosaic.version = 11 : i64} {
  func.func @value_mlp_kernel(%arg0: i32, %arg1: memref<128x8xf32, #tpu.memory_space<vmem>>, %arg2: memref<64x8xf32, #tpu.memory_space<vmem>>, %arg3: memref<64x1xf32, #tpu.memory_space<vmem>>, %arg4: memref<64x64xf32, #tpu.memory_space<vmem>>, %arg5: memref<64x1xf32, #tpu.memory_space<vmem>>, %arg6: memref<1x64xf32, #tpu.memory_space<vmem>>, %arg7: memref<1x1xf32, #tpu.memory_space<vmem>>, %arg8: memref<1x128xf32, #tpu.memory_space<vmem>>) attributes {dimension_semantics = [#tpu.dimension_semantics<parallel>], iteration_bounds = array<i64: 1>, scalar_prefetch = 0 : i64, scratch_operands = 0 : i64, tpu.core_type = #tpu.core_type<tc>, window_params = [{transform_indices = @transform_0, window_bounds = array<i64: 128, 8>}, {pipeline_mode = #tpu.pipeline_mode<synchronous>, transform_indices = @transform_1, window_bounds = array<i64: 64, 8>}, {pipeline_mode = #tpu.pipeline_mode<synchronous>, transform_indices = @transform_2, window_bounds = array<i64: 64, 1>}, {pipeline_mode = #tpu.pipeline_mode<synchronous>, transform_indices = @transform_3, window_bounds = array<i64: 64, 64>}, {pipeline_mode = #tpu.pipeline_mode<synchronous>, transform_indices = @transform_4, window_bounds = array<i64: 64, 1>}, {pipeline_mode = #tpu.pipeline_mode<synchronous>, transform_indices = @transform_5, window_bounds = array<i64: 1, 64>}, {pipeline_mode = #tpu.pipeline_mode<synchronous>, transform_indices = @transform_6, window_bounds = array<i64: 1, 1>}, {transform_indices = @transform_7, window_bounds = array<i64: 1, 128>}]} {
    %c0 = arith.constant 0 : index
    %c0_0 = arith.constant 0 : index
    %0 = vector.load %arg1[%c0, %c0_0] : memref<128x8xf32, #tpu.memory_space<vmem>>, vector<128x8xf32>
    %c0_1 = arith.constant 0 : index
    %c0_2 = arith.constant 0 : index
    %1 = vector.load %arg2[%c0_1, %c0_2] : memref<64x8xf32, #tpu.memory_space<vmem>>, vector<64x8xf32>
    %cst = arith.constant dense<0.000000e+00> : vector<64x128xf32>
    %2 = tpu.matmul %1, %0, %cst {dimension_numbers = #tpu.dot_dimension_numbers<[1], [1], [0], [0], [0, 0, 1, 0], [], []>} : vector<64x8xf32>, vector<128x8xf32>, vector<64x128xf32> -> vector<64x128xf32>
    %c0_3 = arith.constant 0 : index
    %c0_4 = arith.constant 0 : index
    %3 = vector.load %arg3[%c0_3, %c0_4] : memref<64x1xf32, #tpu.memory_space<vmem>>, vector<64x1xf32>
    %4 = vector.broadcast %3 : vector<64x1xf32> to vector<64x128xf32>
    %5 = arith.addf %2, %4 : vector<64x128xf32>
    %6 = math.tanh %5 : vector<64x128xf32>
    %c0_5 = arith.constant 0 : index
    %c0_6 = arith.constant 0 : index
    %7 = vector.load %arg4[%c0_5, %c0_6] : memref<64x64xf32, #tpu.memory_space<vmem>>, vector<64x64xf32>
    %cst_7 = arith.constant dense<0.000000e+00> : vector<64x128xf32>
    %8 = tpu.matmul %7, %6, %cst_7 {dimension_numbers = #tpu.dot_dimension_numbers<[1], [0], [0], [1], [0, 0, 1, 1], [], []>} : vector<64x64xf32>, vector<64x128xf32>, vector<64x128xf32> -> vector<64x128xf32>
    %c0_8 = arith.constant 0 : index
    %c0_9 = arith.constant 0 : index
    %9 = vector.load %arg5[%c0_8, %c0_9] : memref<64x1xf32, #tpu.memory_space<vmem>>, vector<64x1xf32>
    %10 = vector.broadcast %9 : vector<64x1xf32> to vector<64x128xf32>
    %11 = arith.addf %8, %10 : vector<64x128xf32>
    %12 = math.tanh %11 : vector<64x128xf32>
    %c0_10 = arith.constant 0 : index
    %c0_11 = arith.constant 0 : index
    %13 = vector.load %arg6[%c0_10, %c0_11] : memref<1x64xf32, #tpu.memory_space<vmem>>, vector<1x64xf32>
    %cst_12 = arith.constant dense<0.000000e+00> : vector<1x128xf32>
    %14 = tpu.matmul %13, %12, %cst_12 {dimension_numbers = #tpu.dot_dimension_numbers<[1], [0], [0], [1], [0, 0, 1, 1], [], []>} : vector<1x64xf32>, vector<64x128xf32>, vector<1x128xf32> -> vector<1x128xf32>
    %c0_13 = arith.constant 0 : index
    %c0_14 = arith.constant 0 : index
    %15 = vector.load %arg7[%c0_13, %c0_14] : memref<1x1xf32, #tpu.memory_space<vmem>>, vector<1x1xf32>
    %16 = vector.broadcast %15 : vector<1x1xf32> to vector<1x128xf32>
    %17 = arith.addf %14, %16 : vector<1x128xf32>
    %c0_15 = arith.constant 0 : index
    %c0_16 = arith.constant 0 : index
    %18 = vector.load %arg8[%c0_15, %c0_16] : memref<1x128xf32, #tpu.memory_space<vmem>>, vector<1x128xf32>
    tpu.vector_store %arg8[%c0_15, %c0_16], %17 {strides = array<i32>} : memref<1x128xf32, #tpu.memory_space<vmem>>, vector<1x128xf32>,
    return
  }
  func.func @transform_0(%arg0: i32) -> (i32, i32) {
    %c0_i32 = arith.constant 0 : i32
    %c0_i32_0 = arith.constant 0 : i32
    return %arg0, %c0_i32 : i32, i32
  }
  func.func @transform_1(%arg0: i32) -> (i32, i32) {
    %c0_i32 = arith.constant 0 : i32
    %c0_i32_0 = arith.constant 0 : i32
    %c0_i32_1 = arith.constant 0 : i32
    return %c0_i32, %c0_i32_0 : i32, i32
  }
  func.func @transform_2(%arg0: i32) -> (i32, i32) {
    %c0_i32 = arith.constant 0 : i32
    %c0_i32_0 = arith.constant 0 : i32
    %c0_i32_1 = arith.constant 0 : i32
    return %c0_i32, %c0_i32_0 : i32, i32
  }
  func.func @transform_3(%arg0: i32) -> (i32, i32) {
    %c0_i32 = arith.constant 0 : i32
    %c0_i32_0 = arith.constant 0 : i32
    %c0_i32_1 = arith.constant 0 : i32
    return %c0_i32, %c0_i32_0 : i32, i32
  }
  func.func @transform_4(%arg0: i32) -> (i32, i32) {
    %c0_i32 = arith.constant 0 : i32
    %c0_i32_0 = arith.constant 0 : i32
    %c0_i32_1 = arith.constant 0 : i32
    return %c0_i32, %c0_i32_0 : i32, i32
  }
  func.func @transform_5(%arg0: i32) -> (i32, i32) {
    %c0_i32 = arith.constant 0 : i32
    %c0_i32_0 = arith.constant 0 : i32
    %c0_i32_1 = arith.constant 0 : i32
    return %c0_i32, %c0_i32_0 : i32, i32
  }
  func.func @transform_6(%arg0: i32) -> (i32, i32) {
    %c0_i32 = arith.constant 0 : i32
    %c0_i32_0 = arith.constant 0 : i32
    %c0_i32_1 = arith.constant 0 : i32
    return %c0_i32, %c0_i32_0 : i32, i32
  }
  func.func @transform_7(%arg0: i32) -> (i32, i32) {
    %c0_i32 = arith.constant 0 : i32
    %c0_i32_0 = arith.constant 0 : i32
    return %c0_i32, %arg0 : i32, i32
  }
}

</mosaic_0001>

<llo_original>
// kernel: tpu_custom_call.1
$region0: #{tpu_custom_call.1}
  #allocation0 [shape = 'u32[]', space=smem, size = 0x4, offset = 0x4, fixed_abs, tag = 'smem constant byte address 0x4 - core index']
  #allocation1 [shape = 'u32[144,128]{1,0:T(1,128)}', space=vmem, size = 0x12000, scoped, tag = 'internal scratch']
  #allocation2 [shape = 'f32[1,1]{1,0:T(1,128)S(1)}', space=vmem, size = 0x200, scoped, tag = 'scoped memory for tpu_custom_call.1']
  %s0 = inlined_call_operand.vmem [shape: f32[8,8], index: 0, kind: input, shape index: {}]
  %s1 = inlined_call_operand.vmem [shape: f32[64,8], index: 1, kind: input, shape index: {}]
  %s2 = inlined_call_operand.vmem [shape: f32[64,1], index: 2, kind: input, shape index: {}]
  %s3 = inlined_call_operand.vmem [shape: f32[64,64], index: 3, kind: input, shape index: {}]
  %s4 = inlined_call_operand.vmem [shape: f32[64,1], index: 4, kind: input, shape index: {}]
  %s5 = inlined_call_operand.vmem [shape: f32[1,64], index: 5, kind: input, shape index: {}]
  %s6 = inlined_call_operand.<no memory space> [shape: f32[1,1], index: 6, kind: input, shape index: {}]
  %s7 = inlined_call_operand.hbm [shape: f32[1,128], index: 7, kind: output, shape index: {}]
  %s8 = sld [smem:[#allocation0]]
  $region38: #{tpu_custom_call.1} parent=0
    _
  %s10 = ssub.s32 1, %s8
  %s11 = scalar_select 0, %s10, %s8
  %v12 = vstv %s6
  %13 = vst [vmem:[#allocation2] sm:$0x1] %v12
  $region1: #{tpu_custom_call.1} parent=0
    #allocation3 [shape = 'u8[512]{0}', space=vmem, size = 0x400, scoped, tag = 'output window, operand 0, single buffered']
    #allocation4 [shape = 's32[1]{0}', space=sflag, size = 0x4, scoped, tag = 'scoped memory for tpu_custom_call.1']
    %14 = vsyncpa [#allocation4], 0
    // Predicated region
    $region2: #{tpu_custom_call.1} parent=1 // pred_check
      _
    $region3: #{tpu_custom_call.1} parent=1 // pred_check_branch
      %16 = sbr.rel (0) target = $region5
    $region4: #{tpu_custom_call.1} parent=1 // pred_region
      _
    $region5: #{tpu_custom_call.1} parent=1 // pred_fallthru
      _
    // Predicated region
    $region6: #{tpu_custom_call.1} parent=1 // pred_check
      _
    $region7: #{tpu_custom_call.1} parent=1 // pred_check_branch
      %18 = sbr.rel (0) target = $region9
    $region8: #{tpu_custom_call.1} parent=1 // pred_region
      _
    $region9: #{tpu_custom_call.1} parent=1 // pred_fallthru
      _
    // Predicated region
    $region10: #{tpu_custom_call.1} parent=1 // pred_check
      _
    $region11: #{tpu_custom_call.1} parent=1 // pred_check_branch
      %20 = sbr.rel (0) target = $region13
    $region12: #{tpu_custom_call.1} parent=1 // pred_region
      _
    $region13: #{tpu_custom_call.1} parent=1 // pred_fallthru
      _
    // Predicated region
    $region14: #{tpu_custom_call.1} parent=1 // pred_check
      _
    $region15: #{tpu_custom_call.1} parent=1 // pred_check_branch
      %22 = sbr.rel (0) target = $region17
    $region16: #{tpu_custom_call.1} parent=1 // pred_region
      _
    $region17: #{tpu_custom_call.1} parent=1 // pred_fallthru
      _
    // Predicated region
    $region18: #{tpu_custom_call.1} parent=1 // pred_check
      _
    $region19: #{tpu_custom_call.1} parent=1 // pred_check_branch
      %24 = sbr.rel (0) target = $region21
    $region20: #{tpu_custom_call.1} parent=1 // pred_region
      _
    $region21: #{tpu_custom_call.1} parent=1 // pred_fallthru
      _
    // Predicated region
    $region22: #{tpu_custom_call.1} parent=1 // pred_check
      _
    $region23: #{tpu_custom_call.1} parent=1 // pred_check_branch
      %26 = sbr.rel (0) target = $region25
    $region24: #{tpu_custom_call.1} parent=1 // pred_region
      _
    $region25: #{tpu_custom_call.1} parent=1 // pred_fallthru
      _
    // Predicated region
    $region26: #{tpu_custom_call.1} parent=1 // pred_check
      _
    $region27: #{tpu_custom_call.1} parent=1 // pred_check_branch
      %28 = sbr.rel (0) target = $region29
    $region28: #{tpu_custom_call.1} parent=1 // pred_region
      _
    $region29: #{tpu_custom_call.1} parent=1 // pred_fallthru
      _
    %v29 = vld [vmem:[%s0] sm:$0xff]
    %v30 = vld [vmem:[%s0 + $0x8] sm:$0xff]
    %v31 = vld [vmem:[%s0 + $0x10] sm:$0xff]
    %v32 = vld [vmem:[%s0 + $0x18] sm:$0xff]
    %v33 = vld [vmem:[%s0 + $0x20] sm:$0xff]
    %v34 = vld [vmem:[%s0 + $0x28] sm:$0xff]
    %v35 = vld [vmem:[%s0 + $0x30] sm:$0xff]
    %v36 = vld [vmem:[%s0 + $0x38] sm:$0xff]
    %v37 = vld [vmem:[%s0 + $0x40] sm:$0xff]
    %v38 = vld [vmem:[%s0 + $0x48] sm:$0xff]
    %v39 = vld [vmem:[%s0 + $0x50] sm:$0xff]
    %v40 = vld [vmem:[%s0 + $0x58] sm:$0xff]
    %v41 = vld [vmem:[%s0 + $0x60] sm:$0xff]
    %v42 = vld [vmem:[%s0 + $0x68] sm:$0xff]
    %v43 = vld [vmem:[%s0 + $0x70] sm:$0xff]
    %v44 = vld [vmem:[%s0 + $0x78] sm:$0xff]
    %v45 = vld [vmem:[%s1] sm:$0xff]
    %v46 = vld [vmem:[%s1 + $0x8] sm:$0xff]
    %v47 = vld [vmem:[%s1 + $0x10] sm:$0xff]
    %v48 = vld [vmem:[%s1 + $0x18] sm:$0xff]
    %v49 = vld [vmem:[%s1 + $0x20] sm:$0xff]
    %v50 = vld [vmem:[%s1 + $0x28] sm:$0xff]
    %v51 = vld [vmem:[%s1 + $0x30] sm:$0xff]
    %v52 = vld [vmem:[%s1 + $0x38] sm:$0xff]
    %v53 = vld [vmem:[%s2] sm:$0xff]
    %v54 = vld [vmem:[%s2 + $0x8] sm:$0xff]
    %v55 = vld [vmem:[%s2 + $0x10] sm:$0xff]
    %v56 = vld [vmem:[%s2 + $0x18] sm:$0xff]
    %v57 = vld [vmem:[%s2 + $0x20] sm:$0xff]
    %v58 = vld [vmem:[%s2 + $0x28] sm:$0xff]
    %v59 = vld [vmem:[%s2 + $0x30] sm:$0xff]
    %v60 = vld [vmem:[%s2 + $0x38] sm:$0xff]
    %62 = vset.pattern.permute.xlu0 0
    %63 = vperm.xlu0 %62, %v53
    %v64 = vpop.permute.xlu0 %63
    %67 = vset.pattern.permute.xlu0 0
    %68 = vperm.xlu0 %67, %v54
    %v69 = vpop.permute.xlu0 %68
    %72 = vset.pattern.permute.xlu0 0
    %73 = vperm.xlu0 %72, %v55
    %v74 = vpop.permute.xlu0 %73
    %77 = vset.pattern.permute.xlu0 0
    %78 = vperm.xlu0 %77, %v56
    %v79 = vpop.permute.xlu0 %78
    %82 = vset.pattern.permute.xlu0 0
    %83 = vperm.xlu0 %82, %v57
    %v84 = vpop.permute.xlu0 %83
    %87 = vset.pattern.permute.xlu0 0
    %88 = vperm.xlu0 %87, %v58
    %v89 = vpop.permute.xlu0 %88
    %92 = vset.pattern.permute.xlu0 0
    %93 = vperm.xlu0 %92, %v59
    %v94 = vpop.permute.xlu0 %93
    %97 = vset.pattern.permute.xlu0 0
    %98 = vperm.xlu0 %97, %v60
    %v99 = vpop.permute.xlu0 %98
    %vm101 = vcmask 64512
    %v103 = vsel %vm101, %v45, 0
    %v106 = vsel %vm101, %v46, 0
    %v109 = vsel %vm101, %v47, 0
    %v112 = vsel %vm101, %v48, 0
    %v115 = vsel %vm101, %v49, 0
    %v118 = vsel %vm101, %v50, 0
    %v121 = vsel %vm101, %v51, 0
    %v124 = vsel %vm101, %v52, 0
    %v127 = vsel %vm101, %v29, 0
    %v130 = vsel %vm101, %v30, 0
    %v133 = vsel %vm101, %v31, 0
    %v136 = vsel %vm101, %v32, 0
    %v139 = vsel %vm101, %v33, 0
    %v142 = vsel %vm101, %v34, 0
    %v145 = vsel %vm101, %v35, 0
    %v148 = vsel %vm101, %v36, 0
    %v151 = vsel %vm101, %v37, 0
    %v154 = vsel %vm101, %v38, 0
    %v157 = vsel %vm101, %v39, 0
    %v160 = vsel %vm101, %v40, 0
    %v163 = vsel %vm101, %v41, 0
    %v166 = vsel %vm101, %v42, 0
    %v169 = vsel %vm101, %v43, 0
    %v172 = vsel %vm101, %v44, 0
    %174 = vmatprep.subr.mxu0 0.0
    %175 = vmatpush1.xpose.msra.mxu0 %v172
    %176 = vmatprep.subr.mxu0 0.0
    %177 = vmatpush1.xpose.msra.mxu0 %v169
    %178 = vmatprep.subr.mxu0 0.0
    %179 = vmatpush1.xpose.msra.mxu0 %v166
    %180 = vmatprep.subr.mxu0 0.0
    %181 = vmatpush1.xpose.msra.mxu0 %v163
    %182 = vmatprep.subr.mxu0 0.0
    %183 = vmatpush1.xpose.msra.mxu0 %v160
    %184 = vmatprep.subr.mxu0 0.0
    %185 = vmatpush1.xpose.msra.mxu0 %v157
    %186 = vmatprep.subr.mxu0 0.0
    %187 = vmatpush1.xpose.msra.mxu0 %v154
    %188 = vmatprep.subr.mxu0 0.0
    %189 = vmatpush1.xpose.msra.mxu0 %v151
    %190 = vmatprep.subr.mxu0 0.0
    %191 = vmatpush1.xpose.msra.mxu0 %v148
    %192 = vmatprep.subr.mxu0 0.0
    %193 = vmatpush1.xpose.msra.mxu0 %v145
    %194 = vmatprep.subr.mxu0 0.0
    %195 = vmatpush1.xpose.msra.mxu0 %v142
    %196 = vmatprep.subr.mxu0 0.0
    %197 = vmatpush1.xpose.msra.mxu0 %v139
    %198 = vmatprep.subr.mxu0 0.0
    %199 = vmatpush1.xpose.msra.mxu0 %v136
    %200 = vmatprep.subr.mxu0 0.0
    %201 = vmatpush1.xpose.msra.mxu0 %v133
    %202 = vmatprep.subr.mxu0 0.0
    %203 = vmatpush1.xpose.msra.mxu0 %v130
    %204 = vmatprep.subr.mxu0 0.0
    %205 = vmatpush1.xpose.msra.mxu0 %v127
    %206 = vmatprep.subr.mxu0 0.0
    %207 = vmatpush2.xpose.msra.mxu0 0.0
    %208 = vmatprep.subr.mxu0 0.0
    %209 = vmatpush2.xpose.msra.mxu0 0.0
    %210 = vmatprep.subr.mxu0 0.0
    %211 = vmatpush2.xpose.msra.mxu0 0.0
    %212 = vmatprep.subr.mxu0 0.0
    %213 = vmatpush2.xpose.msra.mxu0 0.0
    %214 = vmatprep.subr.mxu0 0.0
    %215 = vmatpush2.xpose.msra.mxu0 0.0
    %216 = vmatprep.subr.mxu0 0.0
    %217 = vmatpush2.xpose.msra.mxu0 0.0
    %218 = vmatprep.subr.mxu0 0.0
    %219 = vmatpush2.xpose.msra.mxu0 0.0
    %220 = vmatprep.subr.mxu0 0.0
    %221 = vmatpush2.xpose.msra.mxu0 0.0
    %222 = vmatprep.subr.mxu0 0.0
    %223 = vmatpush2.xpose.msra.mxu0 0.0
    %224 = vmatprep.subr.mxu0 0.0
    %225 = vmatpush2.xpose.msra.mxu0 0.0
    %226 = vmatprep.subr.mxu0 0.0
    %227 = vmatpush2.xpose.msra.mxu0 0.0
    %228 = vmatprep.subr.mxu0 0.0
    %229 = vmatpush2.xpose.msra.mxu0 0.0
    %230 = vmatprep.subr.mxu0 0.0
    %231 = vmatpush2.xpose.msra.mxu0 0.0
    %232 = vmatprep.subr.mxu0 0.0
    %233 = vmatpush2.xpose.msra.mxu0 0.0
    %234 = vmatprep.subr.mxu0 0.0
    %235 = vmatpush2.xpose.msra.mxu0 0.0
    %236 = vmatprep.subr.mxu0 0.0
    %237 = vmatpush2.xpose.msra.mxu0 0.0
    %238 = vmatprep.mubr.f32.mxu0 0.0
    %239 = vmatmul.mubr.f32.gmra.mxu0 %v103
    %v240 = vpop.f32.mrf.mxu0
    %v241 = vadd.f32 %v64, %v240
    %v242 = vpop.f32.mrf.mxu0
    %243 = vmatprep.mubr.f32.mxu0 0.0
    %244 = vmatmul.mubr.f32.gmra.mxu0 %v106
    %v245 = vpop.f32.mrf.mxu0
    %v246 = vadd.f32 %v69, %v245
    %v247 = vpop.f32.mrf.mxu0
    %248 = vmatprep.mubr.f32.mxu0 0.0
    %249 = vmatmul.mubr.f32.gmra.mxu0 %v109
    %v250 = vpop.f32.mrf.mxu0
    %v251 = vadd.f32 %v74, %v250
    %v252 = vpop.f32.mrf.mxu0
    %253 = vmatprep.mubr.f32.mxu0 0.0
    %254 = vmatmul.mubr.f32.gmra.mxu0 %v112
    %v255 = vpop.f32.mrf.mxu0
    %v256 = vadd.f32 %v79, %v255
    %v257 = vpop.f32.mrf.mxu0
    %258 = vmatprep.mubr.f32.mxu0 0.0
    %259 = vmatmul.mubr.f32.gmra.mxu0 %v115
    %v260 = vpop.f32.mrf.mxu0
    %v261 = vadd.f32 %v84, %v260
    %v262 = vpop.f32.mrf.mxu0
    %263 = vmatprep.mubr.f32.mxu0 0.0
    %264 = vmatmul.mubr.f32.gmra.mxu0 %v118
    %v265 = vpop.f32.mrf.mxu0
    %v266 = vadd.f32 %v89, %v265
    %v267 = vpop.f32.mrf.mxu0
    %268 = vmatprep.mubr.f32.mxu0 0.0
    %269 = vmatmul.mubr.f32.gmra.mxu0 %v121
    %v270 = vpop.f32.mrf.mxu0
    %v271 = vadd.f32 %v94, %v270
    %v272 = vpop.f32.mrf.mxu0
    %273 = vmatprep.mubr.f32.mxu0 0.0
    %274 = vmatmul.mubr.f32.gmra.mxu0 %v124
    %v275 = vpop.f32.mrf.mxu0
    %v276 = vadd.f32 %v99, %v275
    %v277 = vpop.f32.mrf.mxu0
    %278 = vdwg.mxu0
    %v279 = vtanh.pop %v241
    %v280 = vtanh.pop %v246
    %v281 = vtanh.pop %v251
    %v282 = vtanh.pop %v256
    %v283 = vtanh.pop %v261
    %v284 = vtanh.pop %v266
    %v285 = vtanh.pop %v271
    %v286 = vtanh.pop %v276
    %v287 = vld [vmem:[%s3] sm:$0xff]
    %v288 = vld [vmem:[%s3 + $0x8] sm:$0xff]
    %v289 = vld [vmem:[%s3 + $0x10] sm:$0xff]
    %v290 = vld [vmem:[%s3 + $0x18] sm:$0xff]
    %v291 = vld [vmem:[%s3 + $0x20] sm:$0xff]
    %v292 = vld [vmem:[%s3 + $0x28] sm:$0xff]
    %v293 = vld [vmem:[%s3 + $0x30] sm:$0xff]
    %v294 = vld [vmem:[%s3 + $0x38] sm:$0xff]
    %v295 = vld [vmem:[%s4] sm:$0xff]
    %v296 = vld [vmem:[%s4 + $0x8] sm:$0xff]
    %v297 = vld [vmem:[%s4 + $0x10] sm:$0xff]
    %v298 = vld [vmem:[%s4 + $0x18] sm:$0xff]
    %v299 = vld [vmem:[%s4 + $0x20] sm:$0xff]
    %v300 = vld [vmem:[%s4 + $0x28] sm:$0xff]
    %v301 = vld [vmem:[%s4 + $0x30] sm:$0xff]
    %v302 = vld [vmem:[%s4 + $0x38] sm:$0xff]
    %304 = vset.pattern.permute.xlu0 0
    %305 = vperm.xlu0 %304, %v295
    %v306 = vpop.permute.xlu0 %305
    %309 = vset.pattern.permute.xlu0 0
    %310 = vperm.xlu0 %309, %v296
    %v311 = vpop.permute.xlu0 %310
    %314 = vset.pattern.permute.xlu0 0
    %315 = vperm.xlu0 %314, %v297
    %v316 = vpop.permute.xlu0 %315
    %319 = vset.pattern.permute.xlu0 0
    %320 = vperm.xlu0 %319, %v298
    %v321 = vpop.permute.xlu0 %320
    %324 = vset.pattern.permute.xlu0 0
    %325 = vperm.xlu0 %324, %v299
    %v326 = vpop.permute.xlu0 %325
    %329 = vset.pattern.permute.xlu0 0
    %330 = vperm.xlu0 %329, %v300
    %v331 = vpop.permute.xlu0 %330
    %334 = vset.pattern.permute.xlu0 0
    %335 = vperm.xlu0 %334, %v301
    %v336 = vpop.permute.xlu0 %335
    %339 = vset.pattern.permute.xlu0 0
    %340 = vperm.xlu0 %339, %v302
    %v341 = vpop.permute.xlu0 %340
    %vm343 = vcmask 523264
    %v345 = vsel %vm343, %v287, 0
    %v348 = vsel %vm343, %v288, 0
    %v351 = vsel %vm343, %v289, 0
    %v354 = vsel %vm343, %v290, 0
    %v357 = vsel %vm343, %v291, 0
    %v360 = vsel %vm343, %v292, 0
    %v363 = vsel %vm343, %v293, 0
    %v366 = vsel %vm343, %v294, 0
    %368 = vmatprep.subr.mxu0 0.0
    %369 = vmatpush1.msra.mxu0 0.0
    %370 = vmatprep.subr.mxu0 0.0
    %371 = vmatpush1.msra.mxu0 0.0
    %372 = vmatprep.subr.mxu0 0.0
    %373 = vmatpush1.msra.mxu0 0.0
    %374 = vmatprep.subr.mxu0 0.0
    %375 = vmatpush1.msra.mxu0 0.0
    %376 = vmatprep.subr.mxu0 0.0
    %377 = vmatpush1.msra.mxu0 0.0
    %378 = vmatprep.subr.mxu0 0.0
    %379 = vmatpush1.msra.mxu0 0.0
    %380 = vmatprep.subr.mxu0 0.0
    %381 = vmatpush1.msra.mxu0 0.0
    %382 = vmatprep.subr.mxu0 0.0
    %383 = vmatpush1.msra.mxu0 0.0
    %384 = vmatprep.subr.mxu0 0.0
    %385 = vmatpush1.msra.mxu0 %v286
    %386 = vmatprep.subr.mxu0 0.0
    %387 = vmatpush1.msra.mxu0 %v285
    %388 = vmatprep.subr.mxu0 0.0
    %389 = vmatpush1.msra.mxu0 %v284
    %390 = vmatprep.subr.mxu0 0.0
    %391 = vmatpush1.msra.mxu0 %v283
    %392 = vmatprep.subr.mxu0 0.0
    %393 = vmatpush1.msra.mxu0 %v282
    %394 = vmatprep.subr.mxu0 0.0
    %395 = vmatpush1.msra.mxu0 %v281
    %396 = vmatprep.subr.mxu0 0.0
    %397 = vmatpush1.msra.mxu0 %v280
    %398 = vmatprep.subr.mxu0 0.0
    %399 = vmatpush1.msra.mxu0 %v279
    %400 = vmatprep.subr.mxu0 0.0
    %401 = vmatpush2.msra.mxu0 0.0
    %402 = vmatprep.subr.mxu0 0.0
    %403 = vmatpush2.msra.mxu0 0.0
    %404 = vmatprep.subr.mxu0 0.0
    %405 = vmatpush2.msra.mxu0 0.0
    %406 = vmatprep.subr.mxu0 0.0
    %407 = vmatpush2.msra.mxu0 0.0
    %408 = vmatprep.subr.mxu0 0.0
    %409 = vmatpush2.msra.mxu0 0.0
    %410 = vmatprep.subr.mxu0 0.0
    %411 = vmatpush2.msra.mxu0 0.0
    %412 = vmatprep.subr.mxu0 0.0
    %413 = vmatpush2.msra.mxu0 0.0
    %414 = vmatprep.subr.mxu0 0.0
    %415 = vmatpush2.msra.mxu0 0.0
    %416 = vmatprep.subr.mxu0 0.0
    %417 = vmatpush2.msra.mxu0 0.0
    %418 = vmatprep.subr.mxu0 0.0
    %419 = vmatpush2.msra.mxu0 0.0
    %420 = vmatprep.subr.mxu0 0.0
    %421 = vmatpush2.msra.mxu0 0.0
    %422 = vmatprep.subr.mxu0 0.0
    %423 = vmatpush2.msra.mxu0 0.0
    %424 = vmatprep.subr.mxu0 0.0
    %425 = vmatpush2.msra.mxu0 0.0
    %426 = vmatprep.subr.mxu0 0.0
    %427 = vmatpush2.msra.mxu0 0.0
    %428 = vmatprep.subr.mxu0 0.0
    %429 = vmatpush2.msra.mxu0 0.0
    %430 = vmatprep.subr.mxu0 0.0
    %431 = vmatpush2.msra.mxu0 0.0
    %432 = vmatprep.mubr.f32.mxu0 0.0
    %433 = vmatmul.mubr.f32.gmra.mxu0 %v345
    %v434 = vpop.f32.mrf.mxu0
    %v435 = vadd.f32 %v306, %v434
    %v436 = vpop.f32.mrf.mxu0
    %437 = vmatprep.mubr.f32.mxu0 0.0
    %438 = vmatmul.mubr.f32.gmra.mxu0 %v348
    %v439 = vpop.f32.mrf.mxu0
    %v440 = vadd.f32 %v311, %v439
    %v441 = vpop.f32.mrf.mxu0
    %442 = vmatprep.mubr.f32.mxu0 0.0
    %443 = vmatmul.mubr.f32.gmra.mxu0 %v351
    %v444 = vpop.f32.mrf.mxu0
    %v445 = vadd.f32 %v316, %v444
    %v446 = vpop.f32.mrf.mxu0
    %447 = vmatprep.mubr.f32.mxu0 0.0
    %448 = vmatmul.mubr.f32.gmra.mxu0 %v354
    %v449 = vpop.f32.mrf.mxu0
    %v450 = vadd.f32 %v321, %v449
    %v451 = vpop.f32.mrf.mxu0
    %452 = vmatprep.mubr.f32.mxu0 0.0
    %453 = vmatmul.mubr.f32.gmra.mxu0 %v357
    %v454 = vpop.f32.mrf.mxu0
    %v455 = vadd.f32 %v326, %v454
    %v456 = vpop.f32.mrf.mxu0
    %457 = vmatprep.mubr.f32.mxu0 0.0
    %458 = vmatmul.mubr.f32.gmra.mxu0 %v360
    %v459 = vpop.f32.mrf.mxu0
    %v460 = vadd.f32 %v331, %v459
    %v461 = vpop.f32.mrf.mxu0
    %462 = vmatprep.mubr.f32.mxu0 0.0
    %463 = vmatmul.mubr.f32.gmra.mxu0 %v363
    %v464 = vpop.f32.mrf.mxu0
    %v465 = vadd.f32 %v336, %v464
    %v466 = vpop.f32.mrf.mxu0
    %467 = vmatprep.mubr.f32.mxu0 0.0
    %468 = vmatmul.mubr.f32.gmra.mxu0 %v366
    %v469 = vpop.f32.mrf.mxu0
    %v470 = vadd.f32 %v341, %v469
    %v471 = vpop.f32.mrf.mxu0
    %472 = vdwg.mxu0
    %v473 = vtanh.pop %v435
    %v474 = vtanh.pop %v440
    %v475 = vtanh.pop %v445
    %v476 = vtanh.pop %v450
    %v477 = vtanh.pop %v455
    %v478 = vtanh.pop %v460
    %v479 = vtanh.pop %v465
    %v480 = vtanh.pop %v470
    %v481 = vld [vmem:[%s5] sm:$0x1]
    %v482 = vld [vmem:[#allocation2] sm:$0x1]
    %484 = vset.pattern.permute.xlu0 0
    %485 = vperm.xlu0 %484, %v482
    %v486 = vpop.permute.xlu0 %485
    %v488 = vlaneseq
    %v489 = vshrl.u32 %v488, 7
    %v490 = vsub.s32 0, %v489
    %v491 = vrot.slane %v486, %v490
    %v493 = vsel %vm343, %v481, 0
    %495 = vmatprep.subr.mxu0 0.0
    %496 = vmatpush1.msra.mxu0 0.0
    %497 = vmatprep.subr.mxu0 0.0
    %498 = vmatpush1.msra.mxu0 0.0
    %499 = vmatprep.subr.mxu0 0.0
    %500 = vmatpush1.msra.mxu0 0.0
    %501 = vmatprep.subr.mxu0 0.0
    %502 = vmatpush1.msra.mxu0 0.0
    %503 = vmatprep.subr.mxu0 0.0
    %504 = vmatpush1.msra.mxu0 0.0
    %505 = vmatprep.subr.mxu0 0.0
    %506 = vmatpush1.msra.mxu0 0.0
    %507 = vmatprep.subr.mxu0 0.0
    %508 = vmatpush1.msra.mxu0 0.0
    %509 = vmatprep.subr.mxu0 0.0
    %510 = vmatpush1.msra.mxu0 0.0
    %511 = vmatprep.subr.mxu0 0.0
    %512 = vmatpush1.msra.mxu0 %v480
    %513 = vmatprep.subr.mxu0 0.0
    %514 = vmatpush1.msra.mxu0 %v479
    %515 = vmatprep.subr.mxu0 0.0
    %516 = vmatpush1.msra.mxu0 %v478
    %517 = vmatprep.subr.mxu0 0.0
    %518 = vmatpush1.msra.mxu0 %v477
    %519 = vmatprep.subr.mxu0 0.0
    %520 = vmatpush1.msra.mxu0 %v476
    %521 = vmatprep.subr.mxu0 0.0
    %522 = vmatpush1.msra.mxu0 %v475
    %523 = vmatprep.subr.mxu0 0.0
    %524 = vmatpush1.msra.mxu0 %v474
    %525 = vmatprep.subr.mxu0 0.0
    %526 = vmatpush1.msra.mxu0 %v473
    %527 = vmatprep.subr.mxu0 0.0
    %528 = vmatpush2.msra.mxu0 0.0
    %529 = vmatprep.subr.mxu0 0.0
    %530 = vmatpush2.msra.mxu0 0.0
    %531 = vmatprep.subr.mxu0 0.0
    %532 = vmatpush2.msra.mxu0 0.0
    %533 = vmatprep.subr.mxu0 0.0
    %534 = vmatpush2.msra.mxu0 0.0
    %535 = vmatprep.subr.mxu0 0.0
    %536 = vmatpush2.msra.mxu0 0.0
    %537 = vmatprep.subr.mxu0 0.0
    %538 = vmatpush2.msra.mxu0 0.0
    %539 = vmatprep.subr.mxu0 0.0
    %540 = vmatpush2.msra.mxu0 0.0
    %541 = vmatprep.subr.mxu0 0.0
    %542 = vmatpush2.msra.mxu0 0.0
    %543 = vmatprep.subr.mxu0 0.0
    %544 = vmatpush2.msra.mxu0 0.0
    %545 = vmatprep.subr.mxu0 0.0
    %546 = vmatpush2.msra.mxu0 0.0
    %547 = vmatprep.subr.mxu0 0.0
    %548 = vmatpush2.msra.mxu0 0.0
    %549 = vmatprep.subr.mxu0 0.0
    %550 = vmatpush2.msra.mxu0 0.0
    %551 = vmatprep.subr.mxu0 0.0
    %552 = vmatpush2.msra.mxu0 0.0
    %553 = vmatprep.subr.mxu0 0.0
    %554 = vmatpush2.msra.mxu0 0.0
    %555 = vmatprep.subr.mxu0 0.0
    %556 = vmatpush2.msra.mxu0 0.0
    %557 = vmatprep.subr.mxu0 0.0
    %558 = vmatpush2.msra.mxu0 0.0
    %559 = vmatprep.mubr.f32.mxu0 0.0
    %560 = vmatmul.mubr.f32.gmra.mxu0 %v493
    %v561 = vpop.f32.mrf.mxu0
    %v562 = vadd.f32 %v491, %v561
    %v563 = vpop.f32.mrf.mxu0
    %564 = vdwg.mxu0
    %565 = vst [vmem:[#allocation3] sm:$0x1] %v562
    // Predicated region
    $region30: #{tpu_custom_call.1} parent=1 // pred_check
      _
    $region31: #{tpu_custom_call.1} parent=1 // pred_check_branch
      %567 = sbr.rel (0) target = $region33
    $region32: #{tpu_custom_call.1} parent=1 // pred_region
      %s569 = ssub.s32 16, 16
      %570 = vsyncadd [#allocation4], %s569
      %s572 = sshll.u32 [#allocation3], 4
      %s573 = int_to_ptr.vmem [resolvable:$true] %s572
      %575 = dma.vmem_to_hbm [thread:$0]  %s573, 16, %s7, [#allocation4]
    $region33: #{tpu_custom_call.1} parent=1 // pred_fallthru
      _
    // Predicated region
    $region34: #{tpu_custom_call.1} parent=1 // pred_check
      _
    $region35: #{tpu_custom_call.1} parent=1 // pred_check_branch
      %577 = sbr.rel (0) target = $region37
    $region36: #{tpu_custom_call.1} parent=1 // pred_region
      %578 = dma.done [#allocation4], 16
    $region37: #{tpu_custom_call.1} parent=1 // pred_fallthru
      _
    %579 = vsyncpa [#allocation4], 1

</llo_original>
